<compile_context>
chip_gen: v7x
topology: tpu7x:2x2x1
jax: 0.10.0
libtpu: 0.0.40
codegen_flags: <defaults>
</compile_context>

<pallas_src>
import functools

import jax
import jax.numpy as jnp
from jax.experimental import pallas as pl
from jax.experimental.pallas import tpu as pltpu

DROPOUT_P = 0.1


def _round_up(x, m):
    return (x + m - 1) // m * m


def _pad2(a, rows, cols, dtype):
    """Pad a 2-D array to (rows, cols) and cast; skip pad if already aligned."""
    r, c = a.shape
    if (r, c) != (rows, cols):
        a = jnp.pad(a, ((0, rows - r), (0, cols - c)))
    return a.astype(dtype)


def _vmem_capacity_bytes():
    """Per-core VMEM capacity (v5e/v6e: 128 MiB, v7x: 64 MiB); safe fallback."""
    try:
        cap = getattr(pltpu.get_tpu_info(), "vmem_capacity_bytes", None)
        if cap:
            return int(cap)
    except Exception:
        pass
    return 64 * 1024 * 1024  # conservative: v7x per-TensorCore VMEM


def _hash_bits_u32(shape, seed_u32, row0_u32):
    """Stateless counter-based hash -> uint32 bits per element.

    Pure jnp integer ops: lowers on TPU (VPU) and also under the Pallas
    interpreter, unlike the stateful pltpu.prng_* primitives.  Keyed on
    (seed, global row index, column index) so the mask is independent of the
    row tiling.
    """
    r = jax.lax.broadcasted_iota(jnp.uint32, shape, 0) + row0_u32
    c = jax.lax.broadcasted_iota(jnp.uint32, shape, 1)
    x = (seed_u32 * jnp.uint32(0x9E3779B9)) ^ jnp.uint32(0x85EBCA6B)
    x = x ^ (r * jnp.uint32(0xC2B2AE35)) ^ (c * jnp.uint32(0x27D4EB2F))
    # murmur3-style finalizer for bit mixing.
    x = x ^ (x >> 16)
    x = x * jnp.uint32(0x7FEB352D)
    x = x ^ (x >> 15)
    x = x * jnp.uint32(0x846CA68B)
    x = x ^ (x >> 16)
    return x


def ffn_kernel(seed_ref, x_ref, w1_ref, b1_ref, w2_ref, b2_ref, o_ref, acc_ref,
               *, dropout_p, training, compute_dtype, row_tile):
    # Grid = (row tiles ["parallel"], hidden-dim tiles ["arbitrary" reduction]).
    # NB: pl.program_id / pl.num_programs must be called OUTSIDE pl.when bodies
    # (no CPU/interpret lowering inside the cond branch); values are captured.
    i = pl.program_id(0)
    j = pl.program_id(1)
    last_j = pl.num_programs(1) - 1

    @pl.when(j == 0)
    def _init():
        acc_ref[...] = jnp.zeros_like(acc_ref)

    # GEMM 1 on the MXU with f32 accumulation; bias-add + ReLU on the VPU in
    # compute_dtype (bf16 halves the row_tile x hidden_tile intermediate's
    # vreg/VMEM footprint; exact for the f32 checking path).
    h = jnp.dot(x_ref[...], w1_ref[...], preferred_element_type=jnp.float32)
    h = jnp.maximum(h.astype(compute_dtype) + b1_ref[...], 0)
    acc_ref[...] += jnp.dot(h, w2_ref[...], preferred_element_type=jnp.float32)

    if training and dropout_p > 0.0:
        # Static (Python) config; values below are captured by _finalize.
        seed_u32 = seed_ref[0].astype(jnp.uint32)
        row0_u32 = (i * row_tile).astype(jnp.uint32)
        threshold = jnp.uint32(min(int(round(dropout_p * 4294967296.0)),
                                   4294967295))
        scale = jnp.float32(1.0 / (1.0 - dropout_p))

    @pl.when(j == last_j)
    def _finalize():
        y = acc_ref[...] + b2_ref[...]
        if training and dropout_p > 0.0:
            # Inverted dropout: compare raw uint32 hash bits against a
            # precomputed uint32 threshold (no int->float conversion chain).
            bits = _hash_bits_u32(y.shape, seed_u32, row0_u32)
            y = jnp.where(bits >= threshold, y * scale, 0.0)
        o_ref[...] = y.astype(o_ref.dtype)


def prepare_ffn_params(w1, b1, w2, b2, *, compute_dtype=jnp.bfloat16,
                       hidden_tile=None):
    """Pad + cast the FFN weights once.  Cache the result across calls so the
    full weight matrices are not re-read/re-written through HBM per call."""
    d_model, d_hidden = w1.shape
    # v6e/v7x MXU native tile is 256x256: align the lane dims to 256 when
    # d_model is large enough for it to matter (v5e's 128x128 MXU is fine
    # either way); small d_model stays at 128 to limit padding waste.
    dm_align = 256 if d_model > 128 else 128
    dm_pad = _round_up(d_model, dm_align)
    dh_full = _round_up(d_hidden, 128)
    cb = jnp.dtype(compute_dtype).itemsize
    vmem_cap = _vmem_capacity_bytes()

    if hidden_tile is None:
        # Keep W1/W2 fully VMEM-resident whenever their double-buffered
        # footprint fits comfortably: the hidden grid axis then collapses to a
        # single step with constant weight block indices, so Pallas DMAs each
        # weight from HBM exactly once per call instead of once per row tile.
        weight_bytes = 2 * 2 * dm_pad * dh_full * cb
        hidden_tile = dh_full if weight_bytes <= int(0.45 * vmem_cap) else 512
    hidden_tile = _round_up(max(128, min(hidden_tile, dh_full)), 128)
    dh_pad = _round_up(d_hidden, hidden_tile)

    return dict(
        d_model=d_model, d_hidden=d_hidden,
        dm_pad=dm_pad, dh_pad=dh_pad, hidden_tile=hidden_tile,
        compute_dtype=compute_dtype, vmem_cap=vmem_cap,
        w1=_pad2(w1, dm_pad, dh_pad, compute_dtype),
        w2=_pad2(w2, dh_pad, dm_pad, compute_dtype),
        b1=_pad2(b1.reshape(1, -1), 1, dh_pad, compute_dtype),
        b2=_pad2(b2.reshape(1, -1), 1, dm_pad, jnp.float32),
    )


def feed_forward_prepared(x, params, *, seed=0, dropout_p=DROPOUT_P,
                          training=True, row_tile=512):
    """dropout(relu(x @ W1 + b1) @ W2 + b2) using pre-padded params.

    `row_tile` is the arithmetic-intensity knob: W1/W2 are streamed from HBM
    (at most) once per row tile, so FLOPs-per-HBM-byte ~= row_tile.  512
    clears the compute/bandwidth crossover on v5e/v7x; use 768-1024 on v6e if
    the weights do not fit VMEM (when they do fit, weight traffic is paid once
    per call and row_tile mostly stops mattering).
    """
    B, S, d_model = x.shape
    assert d_model == params["d_model"]
    compute_dtype = params["compute_dtype"]
    dm_pad, dh_pad = params["dm_pad"], params["dh_pad"]
    hidden_tile = params["hidden_tile"]
    N = B * S

    # Row tile: sublane-aligned, clamped to the problem, and with an even
    # number of row tiles when there is more than one so v7x's two TensorCores
    # split the "parallel" row axis evenly.
    row_align = 16 if jnp.dtype(compute_dtype).itemsize < 4 else 8
    row_tile = _round_up(max(row_align, min(row_tile, _round_up(N, row_align))),
                         row_align)
    n_tiles = -(-N // row_tile)
    if n_tiles > 1 and n_tiles % 2:
        n_tiles += 1
        row_tile = _round_up(-(-N // n_tiles), row_align)
    n_pad = n_tiles * row_tile

    x2 = x.reshape(N, d_model)
    if (n_pad, dm_pad) != (N, d_model):
        x2 = jnp.pad(x2, ((0, n_pad - N), (0, dm_pad - d_model)))
    x2 = x2.astype(compute_dtype)

    # VMEM budget: double-buffered I/O tiles + f32 accumulator + h temp.
    # The estimate already includes double buffering; add 25% headroom for
    # compiler-internal scratch and cap per-generation from the real VMEM size
    # (128 MiB on v5e/v6e, 64 MiB per TensorCore on v7x).
    cb = jnp.dtype(compute_dtype).itemsize
    ob = jnp.dtype(x.dtype).itemsize
    est = (2 * row_tile * dm_pad * cb            # x tile
           + 2 * dm_pad * hidden_tile * cb       # W1 tile
           + 2 * hidden_tile * cb                # b1 tile
           + 2 * hidden_tile * dm_pad * cb       # W2 tile
           + 2 * dm_pad * 4                      # b2 tile
           + 2 * row_tile * dm_pad * ob          # out tile
           + row_tile * dm_pad * 4               # f32 accumulator scratch
           + row_tile * hidden_tile * 4)         # h intermediate (upper bound)
    vmem_limit = int(min(max(int(1.25 * est), 32 * 1024 * 1024),
                         int(0.8 * params["vmem_cap"])))

    kernel = functools.partial(
        ffn_kernel, dropout_p=float(dropout_p), training=bool(training),
        compute_dtype=compute_dtype, row_tile=int(row_tile))

    # TODO(synk): for very large d_model (>= ~4096) on v7x, add a third
    # "parallel" grid axis over output columns so the f32 accumulator and
    # output tile stay within the 64 MiB VMEM budget at large row tiles.
    grid = (n_tiles, dh_pad // hidden_tile)

    out = pl.pallas_call(
        kernel,
        out_shape=jax.ShapeDtypeStruct((n_pad, dm_pad), x.dtype),
        grid_spec=pltpu.PrefetchScalarGridSpec(
            num_scalar_prefetch=1,                       # dropout seed -> SMEM
            grid=grid,
            in_specs=[
                pl.BlockSpec((row_tile, dm_pad),    lambda i, j, s: (i, 0)),
                pl.BlockSpec((dm_pad, hidden_tile), lambda i, j, s: (0, j)),
                pl.BlockSpec((1, hidden_tile),      lambda i, j, s: (0, j)),
                pl.BlockSpec((hidden_tile, dm_pad), lambda i, j, s: (j, 0)),
                pl.BlockSpec((1, dm_pad),           lambda i, j, s: (0, 0)),
            ],
            out_specs=pl.BlockSpec((row_tile, dm_pad), lambda i, j, s: (i, 0)),
            scratch_shapes=[pltpu.VMEM((row_tile, dm_pad), jnp.float32)],
        ),
        compiler_params=pltpu.CompilerParams(
            dimension_semantics=("parallel", "arbitrary"),
            vmem_limit_bytes=vmem_limit),
    )(jnp.array([seed], dtype=jnp.int32),
      x2, params["w1"], params["b1"], params["w2"], params["b2"])

    return out[:N, :d_model].reshape(B, S, d_model)


def feed_forward(x, w1, b1, w2, b2, *, seed=0, dropout_p=DROPOUT_P,
                 training=True, row_tile=512, hidden_tile=None,
                 compute_dtype=jnp.bfloat16):
    """Convenience wrapper.  For repeated calls, call prepare_ffn_params once
    and reuse it with feed_forward_prepared to avoid per-call weight padding."""
    params = prepare_ffn_params(w1, b1, w2, b2, compute_dtype=compute_dtype,
                                hidden_tile=hidden_tile)
    return feed_forward_prepared(x, params, seed=seed, dropout_p=dropout_p,
                                 training=training, row_tile=row_tile)


if __name__ == "__main__":
    # Small, deterministic setup matching the module: d_model=32, d_hidden=64.
    B, S, d_model, d_hidden = 2, 8, 32, 64
    key = jax.random.PRNGKey(0)
    k1, k2, k3, k4, k5 = jax.random.split(key, 5)

    # PyTorch nn.Linear default init: U(-1/sqrt(fan_in), 1/sqrt(fan_in)).
    bound1 = 1.0 / (d_model ** 0.5)
    w1 = jax.random.uniform(k1, (d_model, d_hidden), jnp.float32, -bound1, bound1)
    b1 = jax.random.uniform(k2, (d_hidden,), jnp.float32, -bound1, bound1)
    bound2 = 1.0 / (d_hidden ** 0.5)
    w2 = jax.random.uniform(k3, (d_hidden, d_model), jnp.float32, -bound2, bound2)
    b2 = jax.random.uniform(k4, (d_model,), jnp.float32, -bound2, bound2)
    x = jax.random.normal(k5, (B, S, d_model), jnp.float32)

    # High-precision pure-JAX reference (eval mode).
    xf = x.reshape(B * S, d_model)
    hp = jax.lax.Precision.HIGHEST
    ref = (jax.lax.dot(jnp.maximum(jax.lax.dot(xf, w1, precision=hp) + b1, 0.0),
                       w2, precision=hp) + b2).reshape(B, S, d_model)

    # 1) Eval mode, f32 compute path: tight check.
    y_f32 = jax.block_until_ready(
        feed_forward(x, w1, b1, w2, b2, training=False,
                     compute_dtype=jnp.float32))
    assert jnp.allclose(y_f32, ref, atol=1e-4, rtol=1e-4), "f32 eval mismatch"

    # 2) Eval mode, default bf16 MXU path: loose tolerance (bf16 inputs).
    y_eval = jax.block_until_ready(
        feed_forward(x, w1, b1, w2, b2, training=False))
    assert jnp.allclose(y_eval, ref, atol=5e-2, rtol=5e-2), "bf16 eval mismatch"

    # 3) Training mode: every element is either dropped (0) or the eval value
    #    scaled by 1/(1-p) (inverted dropout on the same compute path).
    y_train = jax.block_until_ready(
        feed_forward(x, w1, b1, w2, b2, seed=0, training=True))
    assert y_train.shape == (B, S, d_model)
    scaled = y_eval * jnp.float32(1.0 / (1.0 - DROPOUT_P))
    kept = jnp.isclose(y_train, scaled, atol=1e-5, rtol=1e-4)
    dropped = jnp.abs(y_train) < 1e-7
    assert bool(jnp.all(kept | dropped)), "dropout output inconsistent"

    print("KERNEL_OK")
</pallas_src>

<mosaic_0001>
module attributes {stable_mosaic.version = 11 : i64} {
  func.func @ffn_kernel(%arg0: i32, %arg1: i32, %arg2: memref<1xi32, #tpu.memory_space<smem>>, %arg3: memref<16x128xf32, #tpu.memory_space<vmem>>, %arg4: memref<128x128xf32, #tpu.memory_space<vmem>>, %arg5: memref<1x128xf32, #tpu.memory_space<vmem>>, %arg6: memref<128x128xf32, #tpu.memory_space<vmem>>, %arg7: memref<1x128xf32, #tpu.memory_space<vmem>>, %arg8: memref<16x128xf32, #tpu.memory_space<vmem>>, %arg9: memref<16x128xf32, #tpu.memory_space<vmem>>) attributes {dimension_semantics = [#tpu.dimension_semantics<parallel>, #tpu.dimension_semantics<arbitrary>], iteration_bounds = array<i64: 1, 1>, scalar_prefetch = 1 : i64, scratch_operands = 1 : i64, tpu.core_type = #tpu.core_type<tc>, window_params = [{transform_indices = @transform_0, window_bounds = array<i64: 16, 128>}, {transform_indices = @transform_1, window_bounds = array<i64: 128, 128>}, {transform_indices = @transform_2, window_bounds = array<i64: 1, 128>}, {transform_indices = @transform_3, window_bounds = array<i64: 128, 128>}, {pipeline_mode = #tpu.pipeline_mode<synchronous>, transform_indices = @transform_4, window_bounds = array<i64: 1, 128>}, {transform_indices = @transform_5, window_bounds = array<i64: 16, 128>}]} {
    %c0_i32 = arith.constant 0 : i32
    %0 = arith.cmpi eq, %arg1, %c0_i32 : i32
    %1 = arith.extui %0 : i1 to i32
    %c0_i32_0 = arith.constant 0 : i32
    %2 = arith.cmpi ne, %1, %c0_i32_0 : i32
    scf.if %2 {
      %cst_16 = arith.constant 0.000000e+00 : f32
      %19 = vector.broadcast %cst_16 : f32 to vector<16x128xf32>
      %c0_17 = arith.constant 0 : index
      %c0_18 = arith.constant 0 : index
      %20 = vector.load %arg9[%c0_17, %c0_18] : memref<16x128xf32, #tpu.memory_space<vmem>>, vector<16x128xf32>
      tpu.vector_store %arg9[%c0_17, %c0_18], %19 {strides = array<i32>} : memref<16x128xf32, #tpu.memory_space<vmem>>, vector<16x128xf32>,
    } else {
    }
    %c0 = arith.constant 0 : index
    %c0_1 = arith.constant 0 : index
    %3 = vector.load %arg3[%c0, %c0_1] : memref<16x128xf32, #tpu.memory_space<vmem>>, vector<16x128xf32>
    %c0_2 = arith.constant 0 : index
    %c0_3 = arith.constant 0 : index
    %4 = vector.load %arg4[%c0_2, %c0_3] : memref<128x128xf32, #tpu.memory_space<vmem>>, vector<128x128xf32>
    %cst = arith.constant dense<0.000000e+00> : vector<16x128xf32>
    %5 = tpu.matmul %3, %4, %cst {dimension_numbers = #tpu.dot_dimension_numbers<[1], [0], [0], [1], [0, 0, 1, 1], [], []>} : vector<16x128xf32>, vector<128x128xf32>, vector<16x128xf32> -> vector<16x128xf32>
    %c0_4 = arith.constant 0 : index
    %c0_5 = arith.constant 0 : index
    %6 = vector.load %arg5[%c0_4, %c0_5] : memref<1x128xf32, #tpu.memory_space<vmem>>, vector<1x128xf32>
    %7 = vector.broadcast %6 : vector<1x128xf32> to vector<16x128xf32>
    %8 = arith.addf %5, %7 : vector<16x128xf32>
    %cst_6 = arith.constant 0.000000e+00 : f32
    %9 = vector.broadcast %cst_6 : f32 to vector<16x128xf32>
    %10 = arith.maximumf %8, %9 : vector<16x128xf32>
    %c0_7 = arith.constant 0 : index
    %c0_8 = arith.constant 0 : index
    %11 = vector.load %arg9[%c0_7, %c0_8] : memref<16x128xf32, #tpu.memory_space<vmem>>, vector<16x128xf32>
    %c0_9 = arith.constant 0 : index
    %c0_10 = arith.constant 0 : index
    %12 = vector.load %arg6[%c0_9, %c0_10] : memref<128x128xf32, #tpu.memory_space<vmem>>, vector<128x128xf32>
    %cst_11 = arith.constant dense<0.000000e+00> : vector<16x128xf32>
    %13 = tpu.matmul %10, %12, %cst_11 {dimension_numbers = #tpu.dot_dimension_numbers<[1], [0], [0], [1], [0, 0, 1, 1], [], []>} : vector<16x128xf32>, vector<128x128xf32>, vector<16x128xf32> -> vector<16x128xf32>
    %14 = arith.addf %11, %13 : vector<16x128xf32>
    %c0_12 = arith.constant 0 : index
    %c0_13 = arith.constant 0 : index
    %15 = vector.load %arg9[%c0_12, %c0_13] : memref<16x128xf32, #tpu.memory_space<vmem>>, vector<16x128xf32>
    tpu.vector_store %arg9[%c0_12, %c0_13], %14 {strides = array<i32>} : memref<16x128xf32, #tpu.memory_space<vmem>>, vector<16x128xf32>,
    %c0_i32_14 = arith.constant 0 : i32
    %16 = arith.cmpi eq, %arg1, %c0_i32_14 : i32
    %17 = arith.extui %16 : i1 to i32
    %c0_i32_15 = arith.constant 0 : i32
    %18 = arith.cmpi ne, %17, %c0_i32_15 : i32
    scf.if %18 {
      %c0_16 = arith.constant 0 : index
      %c0_17 = arith.constant 0 : index
      %19 = vector.load %arg9[%c0_16, %c0_17] : memref<16x128xf32, #tpu.memory_space<vmem>>, vector<16x128xf32>
      %c0_18 = arith.constant 0 : index
      %c0_19 = arith.constant 0 : index
      %20 = vector.load %arg7[%c0_18, %c0_19] : memref<1x128xf32, #tpu.memory_space<vmem>>, vector<1x128xf32>
      %21 = vector.broadcast %20 : vector<1x128xf32> to vector<16x128xf32>
      %22 = arith.addf %19, %21 : vector<16x128xf32>
      %c0_20 = arith.constant 0 : index
      %c0_21 = arith.constant 0 : index
      %23 = vector.load %arg8[%c0_20, %c0_21] : memref<16x128xf32, #tpu.memory_space<vmem>>, vector<16x128xf32>
      tpu.vector_store %arg8[%c0_20, %c0_21], %22 {strides = array<i32>} : memref<16x128xf32, #tpu.memory_space<vmem>>, vector<16x128xf32>,
    } else {
    }
    return
  }
  func.func @transform_0(%arg0: i32, %arg1: i32, %arg2: memref<1xi32, #tpu.memory_space<smem>>) -> (i32, i32) {
    %c0_i32 = arith.constant 0 : i32
    %c0_i32_0 = arith.constant 0 : i32
    return %arg0, %c0_i32 : i32, i32
  }
  func.func @transform_1(%arg0: i32, %arg1: i32, %arg2: memref<1xi32, #tpu.memory_space<smem>>) -> (i32, i32) {
    %c0_i32 = arith.constant 0 : i32
    %c0_i32_0 = arith.constant 0 : i32
    return %c0_i32, %arg1 : i32, i32
  }
  func.func @transform_2(%arg0: i32, %arg1: i32, %arg2: memref<1xi32, #tpu.memory_space<smem>>) -> (i32, i32) {
    %c0_i32 = arith.constant 0 : i32
    %c0_i32_0 = arith.constant 0 : i32
    return %c0_i32, %arg1 : i32, i32
  }
  func.func @transform_3(%arg0: i32, %arg1: i32, %arg2: memref<1xi32, #tpu.memory_space<smem>>) -> (i32, i32) {
    %c0_i32 = arith.constant 0 : i32
    %c0_i32_0 = arith.constant 0 : i32
    return %arg1, %c0_i32 : i32, i32
  }
  func.func @transform_4(%arg0: i32, %arg1: i32, %arg2: memref<1xi32, #tpu.memory_space<smem>>) -> (i32, i32) {
    %c0_i32 = arith.constant 0 : i32
    %c0_i32_0 = arith.constant 0 : i32
    %c0_i32_1 = arith.constant 0 : i32
    return %c0_i32, %c0_i32_0 : i32, i32
  }
  func.func @transform_5(%arg0: i32, %arg1: i32, %arg2: memref<1xi32, #tpu.memory_space<smem>>) -> (i32, i32) {
    %c0_i32 = arith.constant 0 : i32
    %c0_i32_0 = arith.constant 0 : i32
    return %arg0, %c0_i32 : i32, i32
  }
}

</mosaic_0001>

<llo_original>
// kernel: tpu_custom_call.1
$region0: #{tpu_custom_call.1}
  #allocation0 [shape = 'u32[]', space=smem, size = 0x4, offset = 0x4, fixed_abs, tag = 'smem constant byte address 0x4 - core index']
  #allocation1 [shape = 'u32[144,128]{1,0:T(1,128)}', space=vmem, size = 0x12000, scoped, tag = 'internal scratch']
  #allocation2 [shape = 'f32[16,128]{1,0:T(8,128)}', space=vmem, size = 0x2000, scoped, tag = 'scratch operand']
  #allocation3 [shape = 's32[1]{0}', space=sflag, size = 0x4, scoped, tag = 'scoped memory for tpu_custom_call.1']
  #allocation4 [shape = 's32[1]{0:T(128)S(6)}', space=smem, size = 0x200, scoped, tag = 'prefetched SMEM operand 0']
  %s0 = inlined_call_operand.<no memory space> [shape: s32[1], index: 0, kind: input, shape index: {}]
  %s1 = inlined_call_operand.hbm [shape: f32[16,128], index: 1, kind: input, shape index: {}]
  %s2 = inlined_call_operand.hbm [shape: f32[128,128], index: 2, kind: input, shape index: {}]
  %s3 = inlined_call_operand.vmem [shape: f32[1,128], index: 3, kind: input, shape index: {}]
  %s4 = inlined_call_operand.hbm [shape: f32[128,128], index: 4, kind: input, shape index: {}]
  %s5 = inlined_call_operand.vmem [shape: f32[1,128], index: 5, kind: input, shape index: {}]
  %s6 = inlined_call_operand.hbm [shape: f32[16,128], index: 6, kind: output, shape index: {}]
  %s7 = sld [smem:[#allocation0]]
  $region50: #{tpu_custom_call.1} parent=0
    _
  %s9 = ssub.s32 1, %s7
  %s10 = scalar_select 0, %s9, %s7
  %11 = sst [smem:[#allocation4]] %s0
  $region1: #{tpu_custom_call.1} parent=0
    #allocation5 [shape = 'u8[8192]{0}', space=vmem, size = 0x2000, scoped, tag = 'input window, operand 1, single buffered']
    #allocation6 [shape = 's32[1]{0}', space=sflag, size = 0x4, scoped, tag = 'scoped memory for tpu_custom_call.1']
    #allocation7 [shape = 's32[1]{0}', space=sflag, size = 0x4, scoped, tag = 'scoped memory for tpu_custom_call.1']
    #allocation8 [shape = 'u8[65536]{0}', space=vmem, size = 0x10000, scoped, tag = 'input window, operand 2, single buffered']
    #allocation9 [shape = 's32[1]{0}', space=sflag, size = 0x4, scoped, tag = 'scoped memory for tpu_custom_call.1']
    #allocation10 [shape = 'u8[65536]{0}', space=vmem, size = 0x10000, scoped, tag = 'input window, operand 4, single buffered']
    #allocation11 [shape = 'u8[8192]{0}', space=vmem, size = 0x2000, scoped, tag = 'output window, operand 0, single buffered']
    %12 = vsyncpa [#allocation6], 0
    %13 = vsyncpa [#allocation9], 0
    %14 = vsyncpa [#allocation7], 0
    // Predicated region
    $region2: #{tpu_custom_call.1} parent=1 // pred_check
      _
    $region3: #{tpu_custom_call.1} parent=1 // pred_check_branch
      %16 = sbr.rel (0) target = $region5
    $region4: #{tpu_custom_call.1} parent=1 // pred_region
      %s18 = ssub.s32 256, 256
      %19 = vsyncadd [#allocation6], %s18
      %s20 = sshll.u32 [#allocation5], 4
      %s21 = int_to_ptr.vmem [resolvable:$true] %s20
      %26 = dma.hbm_to_vmem [thread:$0]  %s1, 256, %s21, [#allocation6], 128, 128, 8
    $region5: #{tpu_custom_call.1} parent=1 // pred_fallthru
      _
    // Predicated region
    $region6: #{tpu_custom_call.1} parent=1 // pred_check
      _
    $region7: #{tpu_custom_call.1} parent=1 // pred_check_branch
      %28 = sbr.rel (0) target = $region9
    $region8: #{tpu_custom_call.1} parent=1 // pred_region
      %s30 = ssub.s32 2048, 2048
      %31 = vsyncadd [#allocation9], %s30
      %s32 = sshll.u32 [#allocation8], 4
      %s33 = int_to_ptr.vmem [resolvable:$true] %s32
      %38 = dma.hbm_to_vmem [thread:$0]  %s2, 2048, %s33, [#allocation9], 128, 128, 8
    $region9: #{tpu_custom_call.1} parent=1 // pred_fallthru
      _
    // Predicated region
    $region10: #{tpu_custom_call.1} parent=1 // pred_check
      _
    $region11: #{tpu_custom_call.1} parent=1 // pred_check_branch
      %40 = sbr.rel (0) target = $region13
    $region12: #{tpu_custom_call.1} parent=1 // pred_region
      _
    $region13: #{tpu_custom_call.1} parent=1 // pred_fallthru
      _
    // Predicated region
    $region14: #{tpu_custom_call.1} parent=1 // pred_check
      _
    $region15: #{tpu_custom_call.1} parent=1 // pred_check_branch
      %42 = sbr.rel (0) target = $region17
    $region16: #{tpu_custom_call.1} parent=1 // pred_region
      %s44 = ssub.s32 2048, 2048
      %45 = vsyncadd [#allocation9], %s44
      %s46 = sshll.u32 [#allocation10], 4
      %s47 = int_to_ptr.vmem [resolvable:$true] %s46
      %52 = dma.hbm_to_vmem [thread:$0]  %s4, 2048, %s47, [#allocation9], 128, 128, 8
    $region17: #{tpu_custom_call.1} parent=1 // pred_fallthru
      _
    // Predicated region
    $region18: #{tpu_custom_call.1} parent=1 // pred_check
      _
    $region19: #{tpu_custom_call.1} parent=1 // pred_check_branch
      %54 = sbr.rel (0) target = $region21
    $region20: #{tpu_custom_call.1} parent=1 // pred_region
      _
    $region21: #{tpu_custom_call.1} parent=1 // pred_fallthru
      _
    // Predicated region
    $region22: #{tpu_custom_call.1} parent=1 // pred_check
      _
    $region23: #{tpu_custom_call.1} parent=1 // pred_check_branch
      %56 = sbr.rel (0) target = $region25
    $region24: #{tpu_custom_call.1} parent=1 // pred_region
      %57 = dma.done [#allocation6], 256
    $region25: #{tpu_custom_call.1} parent=1 // pred_fallthru
      _
    // Predicated region
    $region26: #{tpu_custom_call.1} parent=1 // pred_check
      _
    $region27: #{tpu_custom_call.1} parent=1 // pred_check_branch
      %59 = sbr.rel (0) target = $region29
    $region28: #{tpu_custom_call.1} parent=1 // pred_region
      %60 = dma.done [#allocation9], 2048
    $region29: #{tpu_custom_call.1} parent=1 // pred_fallthru
      _
    // Predicated region
    $region30: #{tpu_custom_call.1} parent=1 // pred_check
      _
    $region31: #{tpu_custom_call.1} parent=1 // pred_check_branch
      %62 = sbr.rel (0) target = $region33
    $region32: #{tpu_custom_call.1} parent=1 // pred_region
      %63 = dma.done [#allocation9], 2048
    $region33: #{tpu_custom_call.1} parent=1 // pred_fallthru
      _
    %p64 = scmp.eq.s32.totalorder 0, 0
    // Predicated region
    $region34: #{tpu_custom_call.1} parent=1 // pred_check
      %p65 = pneg %p64
    $region35: #{tpu_custom_call.1} parent=1 // pred_check_branch
      %67 = sbr.rel (%p65) target = $region37
    $region36: #{tpu_custom_call.1} parent=1 // pred_region
      %68 = vst [vmem:[#allocation2] sm:$0xff] 0.0
      %69 = vst [vmem:[#allocation2 + $0x8] sm:$0xff] 0.0
    $region37: #{tpu_custom_call.1} parent=1 // pred_fallthru
      _
    %v70 = vld [vmem:[#allocation5] sm:$0xff]
    %v71 = vld [vmem:[#allocation5 + $0x8] sm:$0xff]
    %v72 = vld [vmem:[#allocation8] sm:$0xff]
    %v73 = vld [vmem:[#allocation8 + $0x8] sm:$0xff]
    %v74 = vld [vmem:[#allocation8 + $0x10] sm:$0xff]
    %v75 = vld [vmem:[#allocation8 + $0x18] sm:$0xff]
    %v76 = vld [vmem:[#allocation8 + $0x20] sm:$0xff]
    %v77 = vld [vmem:[#allocation8 + $0x28] sm:$0xff]
    %v78 = vld [vmem:[#allocation8 + $0x30] sm:$0xff]
    %v79 = vld [vmem:[#allocation8 + $0x38] sm:$0xff]
    %v80 = vld [vmem:[#allocation8 + $0x40] sm:$0xff]
    %v81 = vld [vmem:[#allocation8 + $0x48] sm:$0xff]
    %v82 = vld [vmem:[#allocation8 + $0x50] sm:$0xff]
    %v83 = vld [vmem:[#allocation8 + $0x58] sm:$0xff]
    %v84 = vld [vmem:[#allocation8 + $0x60] sm:$0xff]
    %v85 = vld [vmem:[#allocation8 + $0x68] sm:$0xff]
    %v86 = vld [vmem:[#allocation8 + $0x70] sm:$0xff]
    %v87 = vld [vmem:[#allocation8 + $0x78] sm:$0xff]
    %v88 = vld [vmem:[%s3] sm:$0x1]
    %v90 = vlaneseq
    %v91 = vshrl.u32 %v90, 7
    %v92 = vsub.s32 0, %v91
    %v93 = vrot.slane %v88, %v92
    %95 = vmatprep.subr.mxu0 0.0
    %96 = vmatpush1.msra.mxu0 %v72
    %97 = vmatprep.subr.mxu0 0.0
    %98 = vmatpush1.msra.mxu0 %v73
    %99 = vmatprep.subr.mxu0 0.0
    %100 = vmatpush1.msra.mxu0 %v74
    %101 = vmatprep.subr.mxu0 0.0
    %102 = vmatpush1.msra.mxu0 %v75
    %103 = vmatprep.subr.mxu0 0.0
    %104 = vmatpush1.msra.mxu0 %v76
    %105 = vmatprep.subr.mxu0 0.0
    %106 = vmatpush1.msra.mxu0 %v77
    %107 = vmatprep.subr.mxu0 0.0
    %108 = vmatpush1.msra.mxu0 %v78
    %109 = vmatprep.subr.mxu0 0.0
    %110 = vmatpush1.msra.mxu0 %v79
    %111 = vmatprep.subr.mxu0 0.0
    %112 = vmatpush1.msra.mxu0 %v80
    %113 = vmatprep.subr.mxu0 0.0
    %114 = vmatpush1.msra.mxu0 %v81
    %115 = vmatprep.subr.mxu0 0.0
    %116 = vmatpush1.msra.mxu0 %v82
    %117 = vmatprep.subr.mxu0 0.0
    %118 = vmatpush1.msra.mxu0 %v83
    %119 = vmatprep.subr.mxu0 0.0
    %120 = vmatpush1.msra.mxu0 %v84
    %121 = vmatprep.subr.mxu0 0.0
    %122 = vmatpush1.msra.mxu0 %v85
    %123 = vmatprep.subr.mxu0 0.0
    %124 = vmatpush1.msra.mxu0 %v86
    %125 = vmatprep.subr.mxu0 0.0
    %126 = vmatpush1.msra.mxu0 %v87
    %127 = vmatprep.subr.mxu0 0.0
    %128 = vmatpush1.msra.mxu0 0.0
    %129 = vmatprep.subr.mxu0 0.0
    %130 = vmatpush1.msra.mxu0 0.0
    %131 = vmatprep.subr.mxu0 0.0
    %132 = vmatpush1.msra.mxu0 0.0
    %133 = vmatprep.subr.mxu0 0.0
    %134 = vmatpush1.msra.mxu0 0.0
    %135 = vmatprep.subr.mxu0 0.0
    %136 = vmatpush1.msra.mxu0 0.0
    %137 = vmatprep.subr.mxu0 0.0
    %138 = vmatpush1.msra.mxu0 0.0
    %139 = vmatprep.subr.mxu0 0.0
    %140 = vmatpush1.msra.mxu0 0.0
    %141 = vmatprep.subr.mxu0 0.0
    %142 = vmatpush1.msra.mxu0 0.0
    %143 = vmatprep.subr.mxu0 0.0
    %144 = vmatpush1.msra.mxu0 0.0
    %145 = vmatprep.subr.mxu0 0.0
    %146 = vmatpush1.msra.mxu0 0.0
    %147 = vmatprep.subr.mxu0 0.0
    %148 = vmatpush1.msra.mxu0 0.0
    %149 = vmatprep.subr.mxu0 0.0
    %150 = vmatpush1.msra.mxu0 0.0
    %151 = vmatprep.subr.mxu0 0.0
    %152 = vmatpush1.msra.mxu0 0.0
    %153 = vmatprep.subr.mxu0 0.0
    %154 = vmatpush1.msra.mxu0 0.0
    %155 = vmatprep.subr.mxu0 0.0
    %156 = vmatpush1.msra.mxu0 0.0
    %157 = vmatprep.subr.mxu0 0.0
    %158 = vmatpush1.msra.mxu0 0.0
    %159 = vmatprep.mubr.f32.mxu0 0.0
    %160 = vmatmul.mubr.f32.gmra.mrb[0].mxu0 %v70
    %v161 = vpop.f32.mrb[0].mxu0
    %v162 = vadd.f32 %v93, %v161
    %v163 = vpop.f32.mrb[0].mxu0
    %164 = vmatprep.mubr.f32.mxu0 0.0
    %165 = vmatmul.mubr.f32.gmra.mrb[0].mxu0 %v71
    %v166 = vpop.f32.mrb[0].mxu0
    %v167 = vadd.f32 %v93, %v166
    %v168 = vpop.f32.mrb[0].mxu0
    %169 = vdwg.mxu0
    %v170 = vmax.f32 %v162, 0.0
    %v171 = vmax.f32 %v167, 0.0
    %v172 = vld [vmem:[#allocation2] sm:$0xff]
    %v173 = vld [vmem:[#allocation2 + $0x8] sm:$0xff]
    %v174 = vld [vmem:[#allocation10] sm:$0xff]
    %v175 = vld [vmem:[#allocation10 + $0x8] sm:$0xff]
    %v176 = vld [vmem:[#allocation10 + $0x10] sm:$0xff]
    %v177 = vld [vmem:[#allocation10 + $0x18] sm:$0xff]
    %v178 = vld [vmem:[#allocation10 + $0x20] sm:$0xff]
    %v179 = vld [vmem:[#allocation10 + $0x28] sm:$0xff]
    %v180 = vld [vmem:[#allocation10 + $0x30] sm:$0xff]
    %v181 = vld [vmem:[#allocation10 + $0x38] sm:$0xff]
    %v182 = vld [vmem:[#allocation10 + $0x40] sm:$0xff]
    %v183 = vld [vmem:[#allocation10 + $0x48] sm:$0xff]
    %v184 = vld [vmem:[#allocation10 + $0x50] sm:$0xff]
    %v185 = vld [vmem:[#allocation10 + $0x58] sm:$0xff]
    %v186 = vld [vmem:[#allocation10 + $0x60] sm:$0xff]
    %v187 = vld [vmem:[#allocation10 + $0x68] sm:$0xff]
    %v188 = vld [vmem:[#allocation10 + $0x70] sm:$0xff]
    %v189 = vld [vmem:[#allocation10 + $0x78] sm:$0xff]
    %190 = vmatprep.subr.mxu0 0.0
    %191 = vmatpush1.msra.mxu0 %v174
    %192 = vmatprep.subr.mxu0 0.0
    %193 = vmatpush1.msra.mxu0 %v175
    %194 = vmatprep.subr.mxu0 0.0
    %195 = vmatpush1.msra.mxu0 %v176
    %196 = vmatprep.subr.mxu0 0.0
    %197 = vmatpush1.msra.mxu0 %v177
    %198 = vmatprep.subr.mxu0 0.0
    %199 = vmatpush1.msra.mxu0 %v178
    %200 = vmatprep.subr.mxu0 0.0
    %201 = vmatpush1.msra.mxu0 %v179
    %202 = vmatprep.subr.mxu0 0.0
    %203 = vmatpush1.msra.mxu0 %v180
    %204 = vmatprep.subr.mxu0 0.0
    %205 = vmatpush1.msra.mxu0 %v181
    %206 = vmatprep.subr.mxu0 0.0
    %207 = vmatpush1.msra.mxu0 %v182
    %208 = vmatprep.subr.mxu0 0.0
    %209 = vmatpush1.msra.mxu0 %v183
    %210 = vmatprep.subr.mxu0 0.0
    %211 = vmatpush1.msra.mxu0 %v184
    %212 = vmatprep.subr.mxu0 0.0
    %213 = vmatpush1.msra.mxu0 %v185
    %214 = vmatprep.subr.mxu0 0.0
    %215 = vmatpush1.msra.mxu0 %v186
    %216 = vmatprep.subr.mxu0 0.0
    %217 = vmatpush1.msra.mxu0 %v187
    %218 = vmatprep.subr.mxu0 0.0
    %219 = vmatpush1.msra.mxu0 %v188
    %220 = vmatprep.subr.mxu0 0.0
    %221 = vmatpush1.msra.mxu0 %v189
    %222 = vmatprep.subr.mxu0 0.0
    %223 = vmatpush1.msra.mxu0 0.0
    %224 = vmatprep.subr.mxu0 0.0
    %225 = vmatpush1.msra.mxu0 0.0
    %226 = vmatprep.subr.mxu0 0.0
    %227 = vmatpush1.msra.mxu0 0.0
    %228 = vmatprep.subr.mxu0 0.0
    %229 = vmatpush1.msra.mxu0 0.0
    %230 = vmatprep.subr.mxu0 0.0
    %231 = vmatpush1.msra.mxu0 0.0
    %232 = vmatprep.subr.mxu0 0.0
    %233 = vmatpush1.msra.mxu0 0.0
    %234 = vmatprep.subr.mxu0 0.0
    %235 = vmatpush1.msra.mxu0 0.0
    %236 = vmatprep.subr.mxu0 0.0
    %237 = vmatpush1.msra.mxu0 0.0
    %238 = vmatprep.subr.mxu0 0.0
    %239 = vmatpush1.msra.mxu0 0.0
    %240 = vmatprep.subr.mxu0 0.0
    %241 = vmatpush1.msra.mxu0 0.0
    %242 = vmatprep.subr.mxu0 0.0
    %243 = vmatpush1.msra.mxu0 0.0
    %244 = vmatprep.subr.mxu0 0.0
    %245 = vmatpush1.msra.mxu0 0.0
    %246 = vmatprep.subr.mxu0 0.0
    %247 = vmatpush1.msra.mxu0 0.0
    %248 = vmatprep.subr.mxu0 0.0
    %249 = vmatpush1.msra.mxu0 0.0
    %250 = vmatprep.subr.mxu0 0.0
    %251 = vmatpush1.msra.mxu0 0.0
    %252 = vmatprep.subr.mxu0 0.0
    %253 = vmatpush1.msra.mxu0 0.0
    %254 = vmatprep.mubr.f32.mxu0 0.0
    %255 = vmatmul.mubr.f32.gmra.mrb[0].mxu0 %v170
    %v256 = vpop.f32.mrb[0].mxu0
    %v257 = vadd.f32 0.0, %v256
    %v258 = vpop.f32.mrb[0].mxu0
    %259 = vmatprep.mubr.f32.mxu0 0.0
    %260 = vmatmul.mubr.f32.gmra.mrb[0].mxu0 %v171
    %v261 = vpop.f32.mrb[0].mxu0
    %v262 = vadd.f32 0.0, %v261
    %v263 = vpop.f32.mrb[0].mxu0
    %264 = vdwg.mxu0
    %v265 = vadd.f32 %v172, %v257
    %v266 = vadd.f32 %v173, %v262
    %267 = vst [vmem:[#allocation2] sm:$0xff] %v265
    %268 = vst [vmem:[#allocation2 + $0x8] sm:$0xff] %v266
    // Predicated region
    $region38: #{tpu_custom_call.1} parent=1 // pred_check
      %p269 = pneg %p64
    $region39: #{tpu_custom_call.1} parent=1 // pred_check_branch
      %271 = sbr.rel (%p269) target = $region41
    $region40: #{tpu_custom_call.1} parent=1 // pred_region
      %v272 = vld [vmem:[#allocation2] sm:$0xff]
      %v273 = vld [vmem:[#allocation2 + $0x8] sm:$0xff]
      %v274 = vld [vmem:[%s5] sm:$0x1]
      %v276 = vlaneseq
      %v277 = vshrl.u32 %v276, 7
      %v278 = vsub.s32 0, %v277
      %v279 = vrot.slane %v274, %v278
      %v281 = vadd.f32 %v272, %v279
      %v282 = vadd.f32 %v273, %v279
      %283 = vst [vmem:[#allocation11] sm:$0xff] %v281
      %284 = vst [vmem:[#allocation11 + $0x8] sm:$0xff] %v282
    $region41: #{tpu_custom_call.1} parent=1 // pred_fallthru
      _
    // Predicated region
    $region42: #{tpu_custom_call.1} parent=1 // pred_check
      _
    $region43: #{tpu_custom_call.1} parent=1 // pred_check_branch
      %286 = sbr.rel (0) target = $region45
    $region44: #{tpu_custom_call.1} parent=1 // pred_region
      %s288 = ssub.s32 256, 256
      %289 = vsyncadd [#allocation7], %s288
      %s290 = sshll.u32 [#allocation11], 4
      %s291 = int_to_ptr.vmem [resolvable:$true] %s290
      %296 = dma.vmem_to_hbm [thread:$0]  %s291, 256, %s6, [#allocation7], 128, 128, 8
    $region45: #{tpu_custom_call.1} parent=1 // pred_fallthru
      _
    // Predicated region
    $region46: #{tpu_custom_call.1} parent=1 // pred_check
      _
    $region47: #{tpu_custom_call.1} parent=1 // pred_check_branch
      %298 = sbr.rel (0) target = $region49
    $region48: #{tpu_custom_call.1} parent=1 // pred_region
      %299 = dma.done [#allocation7], 256
    $region49: #{tpu_custom_call.1} parent=1 // pred_fallthru
      _
    %300 = vsyncpa [#allocation6], 1
    %301 = vsyncpa [#allocation9], 1
    %302 = vsyncpa [#allocation7], 1

</llo_original>
